<compile_context>
chip_gen: v7x
topology: tpu7x:2x2x1
jax: 0.10.0
libtpu: 0.0.40
codegen_flags: <defaults>
</compile_context>

<pallas_src>
import numpy as np

import jax
import jax.numpy as jnp
from jax.experimental import pallas as pl
from jax.experimental.pallas import tpu as pltpu

_R0 = 8  # interior row offset in the halo scratches (keeps interior stores 8-sublane aligned)


def _make_band_weights(w_hwio, W):
    """Fold a 3x3 conv's kw taps + width zero-padding into 3 banded matrices.

    Returns band of shape (3, W*Ci, W*Co) with
        band[kh, (wo+kw-1)*Ci + ci, wo*Co + co] = w[kh, kw, ci, co]
    for every output column wo whose input column wo+kw-1 is in range; the
    out-of-range taps hit zero padding and are simply omitted, so the W-axis
    padding is implicit in the band structure.
    """
    KH, KW, Ci, Co = w_hwio.shape
    w = np.asarray(w_hwio, dtype=np.float32)
    band = np.zeros((KH, W * Ci, W * Co), np.float32)
    for kh in range(KH):
        for kw in range(KW):
            for wo in range(W):
                wi = wo + kw - 1
                if 0 <= wi < W:
                    band[kh, wi * Ci:(wi + 1) * Ci, wo * Co:(wo + 1) * Co] = w[kh, kw]
    return jnp.asarray(band)


def _fused_cnn2x_kernel(x_ref, wb1_ref, b1_ref, wb2_ref, b2_ref, o_ref,
                        xrow_ref, mid_ref):
    """Fused conv3x3+ReLU -> conv3x3+ReLU for ONE image, packed (H, W*C) layout.

    x_ref   : (1, H, W*Cin)       packed input rows
    wb1_ref : (3, W*Cin, W*Cmid)  banded layer-1 weights (one matrix per kh)
    b1_ref  : (1, W*Cmid)         W-replicated layer-1 bias
    wb2_ref : (3, W*Cmid, W*Cout) banded layer-2 weights
    b2_ref  : (1, W*Cout)
    o_ref   : (1, H, W*Cout)      packed output rows (exactly the real data)
    xrow_ref: (R0+H+1, W*Cin)     VMEM scratch, interior at rows [R0, R0+H)
    mid_ref : (R0+H+1, W*Cmid)    VMEM scratch for the inter-layer activation
    """
    H = x_ref.shape[1]
    WCi = x_ref.shape[2]
    WCm = wb1_ref.shape[2]
    WCo = wb2_ref.shape[2]

    # ---- halo-only zeroing: one row above + one row below the interior ------
    xrow_ref[_R0 - 1:_R0, :] = jnp.zeros((1, WCi), jnp.float32)
    xrow_ref[_R0 + H:_R0 + H + 1, :] = jnp.zeros((1, WCi), jnp.float32)
    mid_ref[_R0 - 1:_R0, :] = jnp.zeros((1, WCm), jnp.float32)
    mid_ref[_R0 + H:_R0 + H + 1, :] = jnp.zeros((1, WCm), jnp.float32)

    # Aligned interior store of the packed input rows.
    xrow_ref[_R0:_R0 + H, :] = x_ref[0]

    # ---- layer 1: 3 banded matmuls (kh taps), bias, ReLU ---------------------
    acc1 = jnp.zeros((H, WCm), jnp.float32)
    for kh in range(3):
        r = _R0 - 1 + kh
        acc1 = acc1 + jnp.dot(xrow_ref[r:r + H, :], wb1_ref[kh],
                              preferred_element_type=jnp.float32)
    a1 = jnp.maximum(acc1 + b1_ref[...], 0.0)

    # Inter-layer activation stays in VMEM; never round-trips through HBM.
    mid_ref[_R0:_R0 + H, :] = a1

    # ---- layer 2: 3 banded matmuls, bias, ReLU -------------------------------
    acc2 = jnp.zeros((H, WCo), jnp.float32)
    for kh in range(3):
        r = _R0 - 1 + kh
        acc2 = acc2 + jnp.dot(mid_ref[r:r + H, :], wb2_ref[kh],
                              preferred_element_type=jnp.float32)
    o_ref[0] = jnp.maximum(acc2 + b2_ref[...], 0.0).astype(o_ref.dtype)


def cnn_layer2x_forward(x_nchw, wb1, b1p, wb2, b2p):
    """Fused cnn1 -> cnn2 forward. x_nchw: (B, Cin, H, W) f32. Returns NCHW."""
    B, Cin, H, W = x_nchw.shape
    WCi = W * Cin
    WCm = wb1.shape[-1]
    WCo = wb2.shape[-1]
    Cout = WCo // W

    # NCHW -> packed (B, H, W*Cin) rows (channels ride the lane axis with W).
    x = jnp.transpose(x_nchw, (0, 2, 3, 1)).reshape(B, H, WCi)

    flops = 2 * B * H * 3 * (WCi * WCm + WCm * WCo)
    bytes_accessed = 4 * (x.size + wb1.size + b1p.size + wb2.size + b2p.size
                          + B * H * WCo)

    out = pl.pallas_call(
        _fused_cnn2x_kernel,
        out_shape=jax.ShapeDtypeStruct((B, H, WCo), x.dtype),
        grid_spec=pltpu.PrefetchScalarGridSpec(
            num_scalar_prefetch=0,
            grid=(B,),
            in_specs=[
                pl.BlockSpec((1, H, WCi), lambda b: (b, 0, 0)),
                pl.BlockSpec((3, WCi, WCm), lambda b: (0, 0, 0)),
                pl.BlockSpec((1, WCm), lambda b: (0, 0)),
                pl.BlockSpec((3, WCm, WCo), lambda b: (0, 0, 0)),
                pl.BlockSpec((1, WCo), lambda b: (0, 0)),
            ],
            out_specs=pl.BlockSpec((1, H, WCo), lambda b: (b, 0, 0)),
            scratch_shapes=[
                pltpu.VMEM((_R0 + H + 1, WCi), jnp.float32),
                pltpu.VMEM((_R0 + H + 1, WCm), jnp.float32),
            ],
        ),
        compiler_params=pltpu.CompilerParams(
            dimension_semantics=("parallel",)),
        cost_estimate=pl.CostEstimate(
            flops=flops, transcendentals=0, bytes_accessed=bytes_accessed),
    )(x, wb1, b1p, wb2, b2p)

    # Unpack (B, H, W*Cout) -> NCHW. Real-size pass only; no padding to slice.
    return jnp.transpose(out.reshape(B, H, W, Cout), (0, 3, 1, 2))


class CNNLayer:
    """Parameters of one Conv2d(3x3, stride=1, padding=1) + ReLU layer (HWIO)."""

    def __init__(self, c_in, c_out, key):
        k_w, k_b = jax.random.split(key)
        s = float((c_in * 9) ** -0.5)
        self.w = jax.random.uniform(k_w, (3, 3, c_in, c_out), jnp.float32, -s, s)
        self.b = jax.random.uniform(k_b, (c_out,), jnp.float32, -s, s)


class CNNLayer2X:
    """JAX/Pallas equivalent of CNN_layer2X: x -> cnn1(x) -> cnn2(x).

    Both Conv2d(3,3,stride=1,pad=1)+ReLU layers run in a single fused Pallas
    kernel; banded/packed weights are built once (cached per spatial width W),
    not re-padded on every forward call.
    """

    def __init__(self, cnn1, cnn2):
        self.cnn1 = cnn1
        self.cnn2 = cnn2
        self._packed = None  # (W, wb1, b1p, wb2, b2p)

    def _packed_params(self, W):
        if self._packed is None or self._packed[0] != W:
            wb1 = _make_band_weights(self.cnn1.w, W)
            b1p = jnp.tile(self.cnn1.b, W).reshape(1, -1)
            wb2 = _make_band_weights(self.cnn2.w, W)
            b2p = jnp.tile(self.cnn2.b, W).reshape(1, -1)
            self._packed = (W, wb1, b1p, wb2, b2p)
        return self._packed[1:]

    def forward(self, x_nchw):
        W = x_nchw.shape[-1]
        wb1, b1p, wb2, b2p = self._packed_params(W)
        return cnn_layer2x_forward(x_nchw, wb1, b1p, wb2, b2p)

    def flatten(self, x_nchw):
        # cnn2.flatten: flatten all dims after batch.
        return x_nchw.reshape(x_nchw.shape[0], -1)


if __name__ == "__main__":
    key = jax.random.PRNGKey(0)
    kx, k1, k2 = jax.random.split(key, 3)

    B, Cin, H, W = 2, 4, 16, 16
    Cmid, Cout = 8, 8
    x = jax.random.normal(kx, (B, Cin, H, W), jnp.float32)

    model = CNNLayer2X(CNNLayer(Cin, Cmid, k1), CNNLayer(Cmid, Cout, k2))

    y = jax.block_until_ready(model.forward(x))
    assert y.shape == (B, Cout, H, W), y.shape

    # Reference check against XLA conv (same semantics as PyTorch Conv2d pad=1 + ReLU).
    def ref_layer(xn, w, b):
        out = jax.lax.conv_general_dilated(
            xn, w, window_strides=(1, 1), padding=((1, 1), (1, 1)),
            dimension_numbers=("NHWC", "HWIO", "NHWC"))
        return jnp.maximum(out + b[None, None, None, :], 0.0)

    xr = jnp.transpose(x, (0, 2, 3, 1))
    yr = ref_layer(ref_layer(xr, model.cnn1.w, model.cnn1.b),
                   model.cnn2.w, model.cnn2.b)
    yr = jnp.transpose(yr, (0, 3, 1, 2))

    err = float(jnp.max(jnp.abs(y - yr)))
    assert err < 1e-3, f"max abs err = {err}"

    # Exercise the flatten() path too.
    _ = jax.block_until_ready(model.flatten(y))

    print("KERNEL_OK")
</pallas_src>

<mosaic_0001>
module attributes {stable_mosaic.version = 11 : i64} {
  func.func @_fused_cnn2x_kernel(%arg0: i32, %arg1: memref<1x16x64xf32, #tpu.memory_space<vmem>>, %arg2: memref<3x64x128xf32, #tpu.memory_space<vmem>>, %arg3: memref<1x128xf32, #tpu.memory_space<vmem>>, %arg4: memref<3x128x128xf32, #tpu.memory_space<vmem>>, %arg5: memref<1x128xf32, #tpu.memory_space<vmem>>, %arg6: memref<1x16x128xf32, #tpu.memory_space<vmem>>, %arg7: memref<25x64xf32, #tpu.memory_space<vmem>>, %arg8: memref<25x128xf32, #tpu.memory_space<vmem>>) attributes {dimension_semantics = [#tpu.dimension_semantics<parallel>], iteration_bounds = array<i64: 2>, scalar_prefetch = 0 : i64, scratch_operands = 2 : i64, tpu.core_type = #tpu.core_type<tc>, window_params = [{transform_indices = @transform_0, window_bounds = array<i64: 1, 16, 64>}, {pipeline_mode = #tpu.pipeline_mode<synchronous>, transform_indices = @transform_1, window_bounds = array<i64: 3, 64, 128>}, {pipeline_mode = #tpu.pipeline_mode<synchronous>, transform_indices = @transform_2, window_bounds = array<i64: 1, 128>}, {pipeline_mode = #tpu.pipeline_mode<synchronous>, transform_indices = @transform_3, window_bounds = array<i64: 3, 128, 128>}, {pipeline_mode = #tpu.pipeline_mode<synchronous>, transform_indices = @transform_4, window_bounds = array<i64: 1, 128>}, {transform_indices = @transform_5, window_bounds = array<i64: 1, 16, 128>}]} {
    %cst = arith.constant 0.000000e+00 : f32
    %0 = vector.broadcast %cst : f32 to vector<1x64xf32>
    %c7 = arith.constant 7 : index
    %c0 = arith.constant 0 : index
    %1 = vector.load %arg7[%c7, %c0] : memref<25x64xf32, #tpu.memory_space<vmem>>, vector<1x64xf32>
    tpu.vector_store %arg7[%c7, %c0], %0 {strides = array<i32>} : memref<25x64xf32, #tpu.memory_space<vmem>>, vector<1x64xf32>,
    %cst_0 = arith.constant 0.000000e+00 : f32
    %2 = vector.broadcast %cst_0 : f32 to vector<1x64xf32>
    %c24 = arith.constant 24 : index
    %c0_1 = arith.constant 0 : index
    %3 = vector.load %arg7[%c24, %c0_1] : memref<25x64xf32, #tpu.memory_space<vmem>>, vector<1x64xf32>
    tpu.vector_store %arg7[%c24, %c0_1], %2 {strides = array<i32>} : memref<25x64xf32, #tpu.memory_space<vmem>>, vector<1x64xf32>,
    %cst_2 = arith.constant 0.000000e+00 : f32
    %4 = vector.broadcast %cst_2 : f32 to vector<1x128xf32>
    %c7_3 = arith.constant 7 : index
    %c0_4 = arith.constant 0 : index
    %5 = vector.load %arg8[%c7_3, %c0_4] : memref<25x128xf32, #tpu.memory_space<vmem>>, vector<1x128xf32>
    tpu.vector_store %arg8[%c7_3, %c0_4], %4 {strides = array<i32>} : memref<25x128xf32, #tpu.memory_space<vmem>>, vector<1x128xf32>,
    %cst_5 = arith.constant 0.000000e+00 : f32
    %6 = vector.broadcast %cst_5 : f32 to vector<1x128xf32>
    %c24_6 = arith.constant 24 : index
    %c0_7 = arith.constant 0 : index
    %7 = vector.load %arg8[%c24_6, %c0_7] : memref<25x128xf32, #tpu.memory_space<vmem>>, vector<1x128xf32>
    tpu.vector_store %arg8[%c24_6, %c0_7], %6 {strides = array<i32>} : memref<25x128xf32, #tpu.memory_space<vmem>>, vector<1x128xf32>,
    %c0_8 = arith.constant 0 : index
    %c0_9 = arith.constant 0 : index
    %c0_10 = arith.constant 0 : index
    %8 = vector.load %arg1[%c0_8, %c0_9, %c0_10] : memref<1x16x64xf32, #tpu.memory_space<vmem>>, vector<1x16x64xf32>
    %9 = vector.shape_cast %8 : vector<1x16x64xf32> to vector<16x64xf32>
    %c8 = arith.constant 8 : index
    %c0_11 = arith.constant 0 : index
    %10 = vector.load %arg7[%c8, %c0_11] : memref<25x64xf32, #tpu.memory_space<vmem>>, vector<16x64xf32>
    tpu.vector_store %arg7[%c8, %c0_11], %9 {strides = array<i32>} : memref<25x64xf32, #tpu.memory_space<vmem>>, vector<16x64xf32>,
    %cst_12 = arith.constant 0.000000e+00 : f32
    %11 = vector.broadcast %cst_12 : f32 to vector<16x128xf32>
    %c7_13 = arith.constant 7 : index
    %c0_14 = arith.constant 0 : index
    %12 = vector.load %arg7[%c7_13, %c0_14] : memref<25x64xf32, #tpu.memory_space<vmem>>, vector<16x64xf32>
    %c0_15 = arith.constant 0 : index
    %c0_16 = arith.constant 0 : index
    %c0_17 = arith.constant 0 : index
    %13 = vector.load %arg2[%c0_15, %c0_16, %c0_17] : memref<3x64x128xf32, #tpu.memory_space<vmem>>, vector<1x64x128xf32>
    %14 = vector.shape_cast %13 : vector<1x64x128xf32> to vector<64x128xf32>
    %cst_18 = arith.constant dense<0.000000e+00> : vector<16x128xf32>
    %15 = tpu.matmul %12, %14, %cst_18 {dimension_numbers = #tpu.dot_dimension_numbers<[1], [0], [0], [1], [0, 0, 1, 1], [], []>} : vector<16x64xf32>, vector<64x128xf32>, vector<16x128xf32> -> vector<16x128xf32>
    %16 = arith.addf %11, %15 : vector<16x128xf32>
    %c8_19 = arith.constant 8 : index
    %c0_20 = arith.constant 0 : index
    %17 = vector.load %arg7[%c8_19, %c0_20] : memref<25x64xf32, #tpu.memory_space<vmem>>, vector<16x64xf32>
    %c1 = arith.constant 1 : index
    %c0_21 = arith.constant 0 : index
    %c0_22 = arith.constant 0 : index
    %18 = vector.load %arg2[%c1, %c0_21, %c0_22] : memref<3x64x128xf32, #tpu.memory_space<vmem>>, vector<1x64x128xf32>
    %19 = vector.shape_cast %18 : vector<1x64x128xf32> to vector<64x128xf32>
    %cst_23 = arith.constant dense<0.000000e+00> : vector<16x128xf32>
    %20 = tpu.matmul %17, %19, %cst_23 {dimension_numbers = #tpu.dot_dimension_numbers<[1], [0], [0], [1], [0, 0, 1, 1], [], []>} : vector<16x64xf32>, vector<64x128xf32>, vector<16x128xf32> -> vector<16x128xf32>
    %21 = arith.addf %16, %20 : vector<16x128xf32>
    %c9 = arith.constant 9 : index
    %c0_24 = arith.constant 0 : index
    %22 = vector.load %arg7[%c9, %c0_24] : memref<25x64xf32, #tpu.memory_space<vmem>>, vector<16x64xf32>
    %c2 = arith.constant 2 : index
    %c0_25 = arith.constant 0 : index
    %c0_26 = arith.constant 0 : index
    %23 = vector.load %arg2[%c2, %c0_25, %c0_26] : memref<3x64x128xf32, #tpu.memory_space<vmem>>, vector<1x64x128xf32>
    %24 = vector.shape_cast %23 : vector<1x64x128xf32> to vector<64x128xf32>
    %cst_27 = arith.constant dense<0.000000e+00> : vector<16x128xf32>
    %25 = tpu.matmul %22, %24, %cst_27 {dimension_numbers = #tpu.dot_dimension_numbers<[1], [0], [0], [1], [0, 0, 1, 1], [], []>} : vector<16x64xf32>, vector<64x128xf32>, vector<16x128xf32> -> vector<16x128xf32>
    %26 = arith.addf %21, %25 : vector<16x128xf32>
    %c0_28 = arith.constant 0 : index
    %c0_29 = arith.constant 0 : index
    %27 = vector.load %arg3[%c0_28, %c0_29] : memref<1x128xf32, #tpu.memory_space<vmem>>, vector<1x128xf32>
    %28 = vector.broadcast %27 : vector<1x128xf32> to vector<16x128xf32>
    %29 = arith.addf %26, %28 : vector<16x128xf32>
    %cst_30 = arith.constant 0.000000e+00 : f32
    %30 = vector.broadcast %cst_30 : f32 to vector<16x128xf32>
    %31 = arith.maximumf %29, %30 : vector<16x128xf32>
    %c8_31 = arith.constant 8 : index
    %c0_32 = arith.constant 0 : index
    %32 = vector.load %arg8[%c8_31, %c0_32] : memref<25x128xf32, #tpu.memory_space<vmem>>, vector<16x128xf32>
    tpu.vector_store %arg8[%c8_31, %c0_32], %31 {strides = array<i32>} : memref<25x128xf32, #tpu.memory_space<vmem>>, vector<16x128xf32>,
    %cst_33 = arith.constant 0.000000e+00 : f32
    %33 = vector.broadcast %cst_33 : f32 to vector<16x128xf32>
    %c7_34 = arith.constant 7 : index
    %c0_35 = arith.constant 0 : index
    %34 = vector.load %arg8[%c7_34, %c0_35] : memref<25x128xf32, #tpu.memory_space<vmem>>, vector<16x128xf32>
    %c0_36 = arith.constant 0 : index
    %c0_37 = arith.constant 0 : index
    %c0_38 = arith.constant 0 : index
    %35 = vector.load %arg4[%c0_36, %c0_37, %c0_38] : memref<3x128x128xf32, #tpu.memory_space<vmem>>, vector<1x128x128xf32>
    %36 = vector.shape_cast %35 : vector<1x128x128xf32> to vector<128x128xf32>
    %cst_39 = arith.constant dense<0.000000e+00> : vector<16x128xf32>
    %37 = tpu.matmul %34, %36, %cst_39 {dimension_numbers = #tpu.dot_dimension_numbers<[1], [0], [0], [1], [0, 0, 1, 1], [], []>} : vector<16x128xf32>, vector<128x128xf32>, vector<16x128xf32> -> vector<16x128xf32>
    %38 = arith.addf %33, %37 : vector<16x128xf32>
    %c8_40 = arith.constant 8 : index
    %c0_41 = arith.constant 0 : index
    %39 = vector.load %arg8[%c8_40, %c0_41] : memref<25x128xf32, #tpu.memory_space<vmem>>, vector<16x128xf32>
    %c1_42 = arith.constant 1 : index
    %c0_43 = arith.constant 0 : index
    %c0_44 = arith.constant 0 : index
    %40 = vector.load %arg4[%c1_42, %c0_43, %c0_44] : memref<3x128x128xf32, #tpu.memory_space<vmem>>, vector<1x128x128xf32>
    %41 = vector.shape_cast %40 : vector<1x128x128xf32> to vector<128x128xf32>
    %cst_45 = arith.constant dense<0.000000e+00> : vector<16x128xf32>
    %42 = tpu.matmul %39, %41, %cst_45 {dimension_numbers = #tpu.dot_dimension_numbers<[1], [0], [0], [1], [0, 0, 1, 1], [], []>} : vector<16x128xf32>, vector<128x128xf32>, vector<16x128xf32> -> vector<16x128xf32>
    %43 = arith.addf %38, %42 : vector<16x128xf32>
    %c9_46 = arith.constant 9 : index
    %c0_47 = arith.constant 0 : index
    %44 = vector.load %arg8[%c9_46, %c0_47] : memref<25x128xf32, #tpu.memory_space<vmem>>, vector<16x128xf32>
    %c2_48 = arith.constant 2 : index
    %c0_49 = arith.constant 0 : index
    %c0_50 = arith.constant 0 : index
    %45 = vector.load %arg4[%c2_48, %c0_49, %c0_50] : memref<3x128x128xf32, #tpu.memory_space<vmem>>, vector<1x128x128xf32>
    %46 = vector.shape_cast %45 : vector<1x128x128xf32> to vector<128x128xf32>
    %cst_51 = arith.constant dense<0.000000e+00> : vector<16x128xf32>
    %47 = tpu.matmul %44, %46, %cst_51 {dimension_numbers = #tpu.dot_dimension_numbers<[1], [0], [0], [1], [0, 0, 1, 1], [], []>} : vector<16x128xf32>, vector<128x128xf32>, vector<16x128xf32> -> vector<16x128xf32>
    %48 = arith.addf %43, %47 : vector<16x128xf32>
    %c0_52 = arith.constant 0 : index
    %c0_53 = arith.constant 0 : index
    %49 = vector.load %arg5[%c0_52, %c0_53] : memref<1x128xf32, #tpu.memory_space<vmem>>, vector<1x128xf32>
    %50 = vector.broadcast %49 : vector<1x128xf32> to vector<16x128xf32>
    %51 = arith.addf %48, %50 : vector<16x128xf32>
    %cst_54 = arith.constant 0.000000e+00 : f32
    %52 = vector.broadcast %cst_54 : f32 to vector<16x128xf32>
    %53 = arith.maximumf %51, %52 : vector<16x128xf32>
    %c0_55 = arith.constant 0 : index
    %c0_56 = arith.constant 0 : index
    %c0_57 = arith.constant 0 : index
    %54 = vector.load %arg6[%c0_55, %c0_56, %c0_57] : memref<1x16x128xf32, #tpu.memory_space<vmem>>, vector<1x16x128xf32>
    %55 = vector.shape_cast %54 : vector<1x16x128xf32> to vector<16x128xf32>
    %56 = vector.shape_cast %53 : vector<16x128xf32> to vector<1x16x128xf32>
    tpu.vector_store %arg6[%c0_55, %c0_56, %c0_57], %56 {strides = array<i32>} : memref<1x16x128xf32, #tpu.memory_space<vmem>>, vector<1x16x128xf32>,
    return
  }
  func.func @transform_0(%arg0: i32) -> (i32, i32, i32) {
    %c0_i32 = arith.constant 0 : i32
    %c0_i32_0 = arith.constant 0 : i32
    %c0_i32_1 = arith.constant 0 : i32
    return %arg0, %c0_i32, %c0_i32_0 : i32, i32, i32
  }
  func.func @transform_1(%arg0: i32) -> (i32, i32, i32) {
    %c0_i32 = arith.constant 0 : i32
    %c0_i32_0 = arith.constant 0 : i32
    %c0_i32_1 = arith.constant 0 : i32
    %c0_i32_2 = arith.constant 0 : i32
    return %c0_i32, %c0_i32_0, %c0_i32_1 : i32, i32, i32
  }
  func.func @transform_2(%arg0: i32) -> (i32, i32) {
    %c0_i32 = arith.constant 0 : i32
    %c0_i32_0 = arith.constant 0 : i32
    %c0_i32_1 = arith.constant 0 : i32
    return %c0_i32, %c0_i32_0 : i32, i32
  }
  func.func @transform_3(%arg0: i32) -> (i32, i32, i32) {
    %c0_i32 = arith.constant 0 : i32
    %c0_i32_0 = arith.constant 0 : i32
    %c0_i32_1 = arith.constant 0 : i32
    %c0_i32_2 = arith.constant 0 : i32
    return %c0_i32, %c0_i32_0, %c0_i32_1 : i32, i32, i32
  }
  func.func @transform_4(%arg0: i32) -> (i32, i32) {
    %c0_i32 = arith.constant 0 : i32
    %c0_i32_0 = arith.constant 0 : i32
    %c0_i32_1 = arith.constant 0 : i32
    return %c0_i32, %c0_i32_0 : i32, i32
  }
  func.func @transform_5(%arg0: i32) -> (i32, i32, i32) {
    %c0_i32 = arith.constant 0 : i32
    %c0_i32_0 = arith.constant 0 : i32
    %c0_i32_1 = arith.constant 0 : i32
    return %arg0, %c0_i32, %c0_i32_0 : i32, i32, i32
  }
}

</mosaic_0001>

<llo_original>
// kernel: tpu_custom_call.1
$region0: #{tpu_custom_call.1}
  #allocation0 [shape = 'u32[]', space=smem, size = 0x4, offset = 0x4, fixed_abs, tag = 'smem constant byte address 0x4 - core index']
  #allocation1 [shape = 'u32[144,128]{1,0:T(1,128)}', space=vmem, size = 0x12000, scoped, tag = 'internal scratch']
  #allocation2 [shape = 'f32[25,64]{1,0:T(8,128)}', space=vmem, size = 0x4000, scoped, tag = 'scratch operand']
  #allocation3 [shape = 'f32[25,128]{1,0:T(8,128)}', space=vmem, size = 0x4000, scoped, tag = 'scratch operand']
  %s0 = inlined_call_operand.hbm [shape: f32[2,16,64], index: 0, kind: input, shape index: {}]
  %s1 = inlined_call_operand.hbm [shape: f32[3,64,128], index: 1, kind: input, shape index: {}]
  %s2 = inlined_call_operand.vmem [shape: f32[1,128], index: 2, kind: input, shape index: {}]
  %s3 = inlined_call_operand.hbm [shape: f32[3,128,128], index: 3, kind: input, shape index: {}]
  %s4 = inlined_call_operand.vmem [shape: f32[1,128], index: 4, kind: input, shape index: {}]
  %s5 = inlined_call_operand.hbm [shape: f32[2,16,128], index: 5, kind: output, shape index: {}]
  %s6 = sld [smem:[#allocation0]]
  $region65: #{tpu_custom_call.1} parent=0
    _
  %s8 = ssub.s32 1, %s6
  %s9 = scalar_select 0, %s8, %s6
  $region1: #{tpu_custom_call.1} parent=0
    #allocation4 [shape = 'u8[16384]{0}', space=vmem, size = 0x4000, scoped, tag = 'input window, operand 0']
    #allocation5 [shape = 's32[2]{0}', space=sflag, size = 0x8, scoped, tag = 'scoped memory for tpu_custom_call.1']
    #allocation6 [shape = 's32[2]{0}', space=sflag, size = 0x8, scoped, tag = 'scoped memory for tpu_custom_call.1']
    #allocation7 [shape = 'u8[98304]{0}', space=vmem, size = 0x18000, scoped, tag = 'input window, operand 1, single buffered']
    #allocation8 [shape = 's32[1]{0}', space=sflag, size = 0x4, scoped, tag = 'scoped memory for tpu_custom_call.1']
    #allocation9 [shape = 'u8[196608]{0}', space=vmem, size = 0x30000, scoped, tag = 'input window, operand 3, single buffered']
    #allocation10 [shape = 'u8[16384]{0}', space=vmem, size = 0x4000, scoped, tag = 'output window, operand 0']
    %10 = vsyncpa [#allocation5], 0
    %s11 = scalar_lea.sflag [#allocation5], 1
    %12 = vsyncpa %s11, 0
    %13 = vsyncpa [#allocation8], 0
    %14 = vsyncpa [#allocation6], 0
    %s15 = scalar_lea.sflag [#allocation6], 1
    %16 = vsyncpa %s15, 0
    loop: start=0, step=1, limit=4
    $region2: #{tpu_custom_call.1} parent=1 // loop_pre_header
      _
    $region3: #{tpu_custom_call.1} parent=1 // loop_header
      %s18 = sphi 0, %s22
      %p19 = scmp.ge.s32.totalorder %s18, 4
      %s28 = sphi 0, %s30
      %s31 = sphi 0, %s28
      %s32 = sphi 0, %s31
      %s48 = sphi 0, %s32
      %s52 = sphi 0, %s52
      %s54 = sphi 0, %s52
      %s55 = sphi 0, %s54
      %s69 = sphi 0, %s55
      %s73 = sphi 0, %s73
      %s75 = sphi 0, %s73
      %s76 = sphi 0, %s75
      %s90 = sphi 0, %s76
      %s94 = sphi 0, %s94
      %s96 = sphi 0, %s94
      %s97 = sphi 0, %s96
      %s111 = sphi 0, %s97
      %s115 = sphi 0, %s115
      %s117 = sphi 0, %s115
      %s118 = sphi 0, %s117
      %s132 = sphi 0, %s118
      %s138 = sphi 0, %s140
      %s141 = sphi 0, %s138
      %s142 = sphi 0, %s141
      %s158 = sphi 0, %s142
    $region4: #{tpu_custom_call.1} parent=1 // loop_header_branch
      %21 = sbr.rel (%p19) target = $region8
    $region5: #{tpu_custom_call.1} parent=1 // loop_body
      %s23 = ssub.s32 %s18, 1
      %s24 = ssub.s32 %s18, 2
      %s25 = sadd.s32 %s18, 1
      %s26 = ssub.s32 %s18, %s25
      %p27 = scmp.eq.s32.totalorder %s26, 0
      %s29 = sadd.s32 %s28, 1
      %s30 = scalar_select %p27, %s28, %s29
      %p33 = pneg %p27
      %p34 = scmp.eq.s32.totalorder %s18, 1
      %p35 = por %p33, %p34
      %p36 = scmp.ne.s32.totalorder %s28, %s31
      %p37 = scmp.eq.s32.totalorder %s18, 0
      %p38 = por %p36, %p37
      %p39 = scmp.ne.s32.totalorder %s28, %s31
      %p40 = scmp.eq.s32.totalorder %s23, 1
      %p41 = por %p39, %p40
      %p42 = scmp.ne.s32.totalorder %s31, %s32
      %p43 = scmp.eq.s32.totalorder %s23, 0
      %p44 = por %p42, %p43
      %p45 = scmp.ne.s32.totalorder %s31, %s32
      %p46 = scmp.eq.s32.totalorder %s24, 1
      %p47 = por %p45, %p46
      %p49 = scmp.ne.s32.totalorder %s32, %s48
      %p50 = scmp.eq.s32.totalorder %s24, 0
      %p51 = por %p49, %p50
      %s53 = sadd.s32 %s52, 1
      %p56 = scmp.eq.s32.totalorder %s18, 1
      %p57 = scmp.ne.s32.totalorder %s52, %s54
      %p58 = scmp.eq.s32.totalorder %s18, 0
      %p59 = por %p57, %p58
      %p60 = scmp.ne.s32.totalorder %s52, %s54
      %p61 = scmp.eq.s32.totalorder %s23, 1
      %p62 = por %p60, %p61
      %p63 = scmp.ne.s32.totalorder %s54, %s55
      %p64 = scmp.eq.s32.totalorder %s23, 0
      %p65 = por %p63, %p64
      %p66 = scmp.ne.s32.totalorder %s54, %s55
      %p67 = scmp.eq.s32.totalorder %s24, 1
      %p68 = por %p66, %p67
      %p70 = scmp.ne.s32.totalorder %s55, %s69
      %p71 = scmp.eq.s32.totalorder %s24, 0
      %p72 = por %p70, %p71
      %s74 = sadd.s32 %s73, 1
      %p77 = scmp.eq.s32.totalorder %s18, 1
      %p78 = scmp.ne.s32.totalorder %s73, %s75
      %p79 = scmp.eq.s32.totalorder %s18, 0
      %p80 = por %p78, %p79
      %p81 = scmp.ne.s32.totalorder %s73, %s75
      %p82 = scmp.eq.s32.totalorder %s23, 1
      %p83 = por %p81, %p82
      %p84 = scmp.ne.s32.totalorder %s75, %s76
      %p85 = scmp.eq.s32.totalorder %s23, 0
      %p86 = por %p84, %p85
      %p87 = scmp.ne.s32.totalorder %s75, %s76
      %p88 = scmp.eq.s32.totalorder %s24, 1
      %p89 = por %p87, %p88
      %p91 = scmp.ne.s32.totalorder %s76, %s90
      %p92 = scmp.eq.s32.totalorder %s24, 0
      %p93 = por %p91, %p92
      %s95 = sadd.s32 %s94, 1
      %p98 = scmp.eq.s32.totalorder %s18, 1
      %p99 = scmp.ne.s32.totalorder %s94, %s96
      %p100 = scmp.eq.s32.totalorder %s18, 0
      %p101 = por %p99, %p100
      %p102 = scmp.ne.s32.totalorder %s94, %s96
      %p103 = scmp.eq.s32.totalorder %s23, 1
      %p104 = por %p102, %p103
      %p105 = scmp.ne.s32.totalorder %s96, %s97
      %p106 = scmp.eq.s32.totalorder %s23, 0
      %p107 = por %p105, %p106
      %p108 = scmp.ne.s32.totalorder %s96, %s97
      %p109 = scmp.eq.s32.totalorder %s24, 1
      %p110 = por %p108, %p109
      %p112 = scmp.ne.s32.totalorder %s97, %s111
      %p113 = scmp.eq.s32.totalorder %s24, 0
      %p114 = por %p112, %p113
      %s116 = sadd.s32 %s115, 1
      %p119 = scmp.eq.s32.totalorder %s18, 1
      %p120 = scmp.ne.s32.totalorder %s115, %s117
      %p121 = scmp.eq.s32.totalorder %s18, 0
      %p122 = por %p120, %p121
      %p123 = scmp.ne.s32.totalorder %s115, %s117
      %p124 = scmp.eq.s32.totalorder %s23, 1
      %p125 = por %p123, %p124
      %p126 = scmp.ne.s32.totalorder %s117, %s118
      %p127 = scmp.eq.s32.totalorder %s23, 0
      %p128 = por %p126, %p127
      %p129 = scmp.ne.s32.totalorder %s117, %s118
      %p130 = scmp.eq.s32.totalorder %s24, 1
      %p131 = por %p129, %p130
      %p133 = scmp.ne.s32.totalorder %s118, %s132
      %p134 = scmp.eq.s32.totalorder %s24, 0
      %p135 = por %p133, %p134
      %s136 = ssub.s32 %s18, %s25
      %p137 = scmp.eq.s32.totalorder %s136, 0
      %s139 = sadd.s32 %s138, 1
      %s140 = scalar_select %p137, %s138, %s139
      %p143 = pneg %p137
      %p144 = scmp.eq.s32.totalorder %s18, 1
      %p145 = por %p143, %p144
      %p146 = scmp.ne.s32.totalorder %s138, %s141
      %p147 = scmp.eq.s32.totalorder %s18, 0
      %p148 = por %p146, %p147
      %p149 = scmp.ne.s32.totalorder %s138, %s141
      %p150 = scmp.eq.s32.totalorder %s23, 1
      %p151 = por %p149, %p150
      %p152 = scmp.ne.s32.totalorder %s141, %s142
      %p153 = scmp.eq.s32.totalorder %s23, 0
      %p154 = por %p152, %p153
      %p155 = scmp.ne.s32.totalorder %s141, %s142
      %p156 = scmp.eq.s32.totalorder %s24, 1
      %p157 = por %p155, %p156
      %p159 = scmp.ne.s32.totalorder %s142, %s158
      %p160 = scmp.eq.s32.totalorder %s24, 0
      %p161 = por %p159, %p160
      %p162 = scmp.le.s32.totalorder 1, %s18
      %p163 = scmp.lt.s32.totalorder %s18, 3
      %p164 = pnand %p162, %p163
      %p165 = pneg %p164
      // Predicated region
      $region9: #{tpu_custom_call.1} parent=5 // pred_check
        _
      $region10: #{tpu_custom_call.1} parent=5 // pred_check_branch
        %167 = sbr.rel (%p164) target = $region12
      $region11: #{tpu_custom_call.1} parent=5 // pred_region
        %s168 = ssub.s32 %s18, 1
        // Predicated region
        $region13: #{tpu_custom_call.1} parent=11 // pred_check
          %p169 = pneg %p65
        $region14: #{tpu_custom_call.1} parent=11 // pred_check_branch
          %171 = sbr.rel (%p169) target = $region16
        $region15: #{tpu_custom_call.1} parent=11 // pred_region
          %s173 = ssub.s32 3072, 3072
          %174 = vsyncadd [#allocation8], %s173
          %s175 = sshll.u32 [#allocation7], 4
          %s176 = int_to_ptr.vmem [resolvable:$true] %s175
          %181 = dma.hbm_to_vmem [thread:$0]  %s1, 3072, %s176, [#allocation8], 128, 128, 8
        $region16: #{tpu_custom_call.1} parent=11 // pred_fallthru
          _
        // Predicated region
        $region17: #{tpu_custom_call.1} parent=11 // pred_check
          %p182 = pneg %p86
        $region18: #{tpu_custom_call.1} parent=11 // pred_check_branch
          %184 = sbr.rel (%p182) target = $region20
        $region19: #{tpu_custom_call.1} parent=11 // pred_region
          _
        $region20: #{tpu_custom_call.1} parent=11 // pred_fallthru
          _
        // Predicated region
        $region21: #{tpu_custom_call.1} parent=11 // pred_check
          %p185 = pneg %p107
        $region22: #{tpu_custom_call.1} parent=11 // pred_check_branch
          %187 = sbr.rel (%p185) target = $region24
        $region23: #{tpu_custom_call.1} parent=11 // pred_region
          %s189 = ssub.s32 6144, 6144
          %190 = vsyncadd [#allocation8], %s189
          %s191 = sshll.u32 [#allocation9], 4
          %s192 = int_to_ptr.vmem [resolvable:$true] %s191
          %197 = dma.hbm_to_vmem [thread:$0]  %s3, 6144, %s192, [#allocation8], 128, 128, 8
        $region24: #{tpu_custom_call.1} parent=11 // pred_fallthru
          _
        // Predicated region
        $region25: #{tpu_custom_call.1} parent=11 // pred_check
          %p198 = pneg %p128
        $region26: #{tpu_custom_call.1} parent=11 // pred_check_branch
          %200 = sbr.rel (%p198) target = $region28
        $region27: #{tpu_custom_call.1} parent=11 // pred_region
          _
        $region28: #{tpu_custom_call.1} parent=11 // pred_fallthru
          _
      $region12: #{tpu_custom_call.1} parent=5 // pred_fallthru
        _
      %p201 = scmp.lt.s32.totalorder %s18, 2
      // Predicated region
      $region29: #{tpu_custom_call.1} parent=5 // pred_check
        %p202 = pneg %p201
      $region30: #{tpu_custom_call.1} parent=5 // pred_check_branch
        %204 = sbr.rel (%p202) target = $region32
      $region31: #{tpu_custom_call.1} parent=5 // pred_region
        // Predicated region
        $region33: #{tpu_custom_call.1} parent=31 // pred_check
          %p205 = pneg %p38
        $region34: #{tpu_custom_call.1} parent=31 // pred_check_branch
          %207 = sbr.rel (%p205) target = $region36
        $region35: #{tpu_custom_call.1} parent=31 // pred_region
          %s208 = sand.u32 %s28, 1
          %s209 = scalar_lea.sflag [#allocation5], %s208
          %s210 = sand.u32 %s28, 1
          %s211 = smul.addr %s210, 16
          %s212 = scalar_lea.vmem [#allocation4], %s211
          %s214 = ssub.s32 256, 256
          %215 = vsyncadd %s209, %s214
          %s216 = smul.addr %s18, 2
          %s217 = smul.addr %s216, 128
          %s218 = scalar_lea.hbm %s0, %s217
          %s219 = sshll.u32 %s212, 4
          %s220 = int_to_ptr.vmem [resolvable:$true] %s219
          %225 = dma.hbm_to_vmem [thread:$0]  %s218, 256, %s220, %s209, 128, 128, 8
        $region36: #{tpu_custom_call.1} parent=31 // pred_fallthru
          _
      $region32: #{tpu_custom_call.1} parent=5 // pred_fallthru
        _
      %p226 = scmp.le.s32.totalorder 1, %s18
      %p227 = scmp.lt.s32.totalorder %s18, 3
      %p228 = pnand %p226, %p227
      %p229 = pneg %p228
      // Predicated region
      $region37: #{tpu_custom_call.1} parent=5 // pred_check
        _
      $region38: #{tpu_custom_call.1} parent=5 // pred_check_branch
        %231 = sbr.rel (%p228) target = $region40
      $region39: #{tpu_custom_call.1} parent=5 // pred_region
        %s232 = ssub.s32 %s18, 1
        %s233 = sand.u32 %s31, 1
        %s234 = scalar_lea.sflag [#allocation5], %s233
        %s235 = sand.u32 %s31, 1
        %s236 = smul.addr %s235, 16
        %s237 = scalar_lea.vmem [#allocation4], %s236
        // Predicated region
        $region41: #{tpu_custom_call.1} parent=39 // pred_check
          %p238 = pneg %p44
        $region42: #{tpu_custom_call.1} parent=39 // pred_check_branch
          %240 = sbr.rel (%p238) target = $region44
        $region43: #{tpu_custom_call.1} parent=39 // pred_region
          %241 = dma.done %s234, 256
        $region44: #{tpu_custom_call.1} parent=39 // pred_fallthru
          _
        // Predicated region
        $region45: #{tpu_custom_call.1} parent=39 // pred_check
          %p242 = pneg %p65
        $region46: #{tpu_custom_call.1} parent=39 // pred_check_branch
          %244 = sbr.rel (%p242) target = $region48
        $region47: #{tpu_custom_call.1} parent=39 // pred_region
          %245 = dma.done [#allocation8], 3072
        $region48: #{tpu_custom_call.1} parent=39 // pred_fallthru
          _
        // Predicated region
        $region49: #{tpu_custom_call.1} parent=39 // pred_check
          %p246 = pneg %p107
        $region50: #{tpu_custom_call.1} parent=39 // pred_check_branch
          %248 = sbr.rel (%p246) target = $region52
        $region51: #{tpu_custom_call.1} parent=39 // pred_region
          %249 = dma.done [#allocation8], 6144
        $region52: #{tpu_custom_call.1} parent=39 // pred_fallthru
          _
        %s250 = sand.u32 %s31, 1
        %s251 = scalar_lea.sflag [#allocation5], %s250
        %s252 = sand.u32 %s31, 1
        %s253 = smul.addr %s252, 16
        %s254 = scalar_lea.vmem [#allocation4], %s253
        %p255 = pneg %p44
        %p256 = pneg %p41
        %p257 = pneg %p65
        %p258 = pneg %p62
        %p259 = pneg %p86
        %p260 = pneg %p83
        %p261 = pneg %p107
        %p262 = pneg %p104
        %p263 = pneg %p128
        %p264 = pneg %p125
        %p265 = pneg %p154
        %p266 = pneg %p151
        %s267 = sand.u32 %s141, 1
        %s268 = scalar_lea.sflag [#allocation6], %s267
        %s269 = sand.u32 %s141, 1
        %s270 = smul.addr %s269, 16
        %s271 = scalar_lea.vmem [#allocation10], %s270
        %vm272 = vcmask 516096
        %273 = vst.msk [vmem:[#allocation2 + $0x7] sm:$0x1] %vm272, 0.0
        %274 = vst.msk [vmem:[#allocation2 + $0x18] sm:$0x1] %vm272, 0.0
        %275 = vst [vmem:[#allocation3 + $0x7] sm:$0x1] 0.0
        %276 = vst [vmem:[#allocation3 + $0x18] sm:$0x1] 0.0
        %v277 = vld [vmem:[%s237] sm:$0xff]
        %v278 = vld [vmem:[%s237 + $0x8] sm:$0xff]
        %vm279 = vcmask 523264
        %280 = vst.msk [vmem:[#allocation2 + $0x8] sm:$0xff] %vm279, %v277
        %281 = vst.msk [vmem:[#allocation2 + $0x10] sm:$0xff] %vm279, %v278
        %v282 = vld [vmem:[#allocation2 + $0x7] sm:$0xff]
        %v283 = vld [vmem:[#allocation2 + $0xf] sm:$0xff]
        %v284 = vld [vmem:[#allocation7] sm:$0xff]
        %v285 = vld [vmem:[#allocation7 + $0x8] sm:$0xff]
        %v286 = vld [vmem:[#allocation7 + $0x10] sm:$0xff]
        %v287 = vld [vmem:[#allocation7 + $0x18] sm:$0xff]
        %v288 = vld [vmem:[#allocation7 + $0x20] sm:$0xff]
        %v289 = vld [vmem:[#allocation7 + $0x28] sm:$0xff]
        %v290 = vld [vmem:[#allocation7 + $0x30] sm:$0xff]
        %v291 = vld [vmem:[#allocation7 + $0x38] sm:$0xff]
        %v292 = vld [vmem:[#allocation2 + $0x8] sm:$0xff]
        %v293 = vld [vmem:[#allocation2 + $0x10] sm:$0xff]
        %s294 = scalar_lea.vmem [#allocation7], 64
        %v295 = vld [vmem:[%s294] sm:$0xff]
        %v296 = vld [vmem:[%s294 + $0x8] sm:$0xff]
        %v297 = vld [vmem:[%s294 + $0x10] sm:$0xff]
        %v298 = vld [vmem:[%s294 + $0x18] sm:$0xff]
        %v299 = vld [vmem:[%s294 + $0x20] sm:$0xff]
        %v300 = vld [vmem:[%s294 + $0x28] sm:$0xff]
        %v301 = vld [vmem:[%s294 + $0x30] sm:$0xff]
        %v302 = vld [vmem:[%s294 + $0x38] sm:$0xff]
        %v304 = vsel %vm279, %v292, 0
        %v307 = vsel %vm279, %v293, 0
        %309 = vmatprep.subr.mxu0 0.0
        %310 = vmatpush1.msra.mxu0 %v295
        %311 = vmatprep.subr.mxu0 0.0
        %312 = vmatpush1.msra.mxu0 %v296
        %313 = vmatprep.subr.mxu0 0.0
        %314 = vmatpush1.msra.mxu0 %v297
        %315 = vmatprep.subr.mxu0 0.0
        %316 = vmatpush1.msra.mxu0 %v298
        %317 = vmatprep.subr.mxu0 0.0
        %318 = vmatpush1.msra.mxu0 %v299
        %319 = vmatprep.subr.mxu0 0.0
        %320 = vmatpush1.msra.mxu0 %v300
        %321 = vmatprep.subr.mxu0 0.0
        %322 = vmatpush1.msra.mxu0 %v301
        %323 = vmatprep.subr.mxu0 0.0
        %324 = vmatpush1.msra.mxu0 %v302
        %325 = vmatprep.subr.mxu0 0.0
        %326 = vmatpush1.msra.mxu0 0.0
        %327 = vmatprep.subr.mxu0 0.0
        %328 = vmatpush1.msra.mxu0 0.0
        %329 = vmatprep.subr.mxu0 0.0
        %330 = vmatpush1.msra.mxu0 0.0
        %331 = vmatprep.subr.mxu0 0.0
        %332 = vmatpush1.msra.mxu0 0.0
        %333 = vmatprep.subr.mxu0 0.0
        %334 = vmatpush1.msra.mxu0 0.0
        %335 = vmatprep.subr.mxu0 0.0
        %336 = vmatpush1.msra.mxu0 0.0
        %337 = vmatprep.subr.mxu0 0.0
        %338 = vmatpush1.msra.mxu0 0.0
        %339 = vmatprep.subr.mxu0 0.0
        %340 = vmatpush1.msra.mxu0 0.0
        %341 = vmatprep.subr.mxu0 0.0
        %342 = vmatpush1.msra.mxu0 0.0
        %343 = vmatprep.subr.mxu0 0.0
        %344 = vmatpush1.msra.mxu0 0.0
        %345 = vmatprep.subr.mxu0 0.0
        %346 = vmatpush1.msra.mxu0 0.0
        %347 = vmatprep.subr.mxu0 0.0
        %348 = vmatpush1.msra.mxu0 0.0
        %349 = vmatprep.subr.mxu0 0.0
        %350 = vmatpush1.msra.mxu0 0.0
        %351 = vmatprep.subr.mxu0 0.0
        %352 = vmatpush1.msra.mxu0 0.0
        %353 = vmatprep.subr.mxu0 0.0
        %354 = vmatpush1.msra.mxu0 0.0
        %355 = vmatprep.subr.mxu0 0.0
        %356 = vmatpush1.msra.mxu0 0.0
        %357 = vmatprep.subr.mxu0 0.0
        %358 = vmatpush1.msra.mxu0 0.0
        %359 = vmatprep.subr.mxu0 0.0
        %360 = vmatpush1.msra.mxu0 0.0
        %361 = vmatprep.subr.mxu0 0.0
        %362 = vmatpush1.msra.mxu0 0.0
        %363 = vmatprep.subr.mxu0 0.0
        %364 = vmatpush1.msra.mxu0 0.0
        %365 = vmatprep.subr.mxu0 0.0
        %366 = vmatpush1.msra.mxu0 0.0
        %367 = vmatprep.subr.mxu0 0.0
        %368 = vmatpush1.msra.mxu0 0.0
        %369 = vmatprep.subr.mxu0 0.0
        %370 = vmatpush1.msra.mxu0 0.0
        %371 = vmatprep.subr.mxu0 0.0
        %372 = vmatpush1.msra.mxu0 0.0
        %373 = vmatprep.mubr.f32.mxu0 0.0
        %374 = vmatmul.mubr.f32.gmra.mrb[0].mxu0 %v304
        %v375 = vpop.f32.mrb[0].mxu0
        %v376 = vadd.f32 0.0, %v375
        %v377 = vpop.f32.mrb[0].mxu0
        %378 = vmatprep.mubr.f32.mxu0 0.0
        %379 = vmatmul.mubr.f32.gmra.mrb[0].mxu0 %v307
        %v380 = vpop.f32.mrb[0].mxu0
        %v381 = vadd.f32 0.0, %v380
        %v382 = vpop.f32.mrb[0].mxu0
        %383 = vdwg.mxu0
        %v385 = vsel %vm279, %v282, 0
        %v388 = vsel %vm279, %v283, 0
        %390 = vmatprep.subr.mxu0 0.0
        %391 = vmatpush1.msra.mxu0 %v284
        %392 = vmatprep.subr.mxu0 0.0
        %393 = vmatpush1.msra.mxu0 %v285
        %394 = vmatprep.subr.mxu0 0.0
        %395 = vmatpush1.msra.mxu0 %v286
        %396 = vmatprep.subr.mxu0 0.0
        %397 = vmatpush1.msra.mxu0 %v287
        %398 = vmatprep.subr.mxu0 0.0
        %399 = vmatpush1.msra.mxu0 %v288
        %400 = vmatprep.subr.mxu0 0.0
        %401 = vmatpush1.msra.mxu0 %v289
        %402 = vmatprep.subr.mxu0 0.0
        %403 = vmatpush1.msra.mxu0 %v290
        %404 = vmatprep.subr.mxu0 0.0
        %405 = vmatpush1.msra.mxu0 %v291
        %406 = vmatprep.subr.mxu0 0.0
        %407 = vmatpush1.msra.mxu0 0.0
        %408 = vmatprep.subr.mxu0 0.0
        %409 = vmatpush1.msra.mxu0 0.0
        %410 = vmatprep.subr.mxu0 0.0
        %411 = vmatpush1.msra.mxu0 0.0
        %412 = vmatprep.subr.mxu0 0.0
        %413 = vmatpush1.msra.mxu0 0.0
        %414 = vmatprep.subr.mxu0 0.0
        %415 = vmatpush1.msra.mxu0 0.0
        %416 = vmatprep.subr.mxu0 0.0
        %417 = vmatpush1.msra.mxu0 0.0
        %418 = vmatprep.subr.mxu0 0.0
        %419 = vmatpush1.msra.mxu0 0.0
        %420 = vmatprep.subr.mxu0 0.0
        %421 = vmatpush1.msra.mxu0 0.0
        %422 = vmatprep.subr.mxu0 0.0
        %423 = vmatpush1.msra.mxu0 0.0
        %424 = vmatprep.subr.mxu0 0.0
        %425 = vmatpush1.msra.mxu0 0.0
        %426 = vmatprep.subr.mxu0 0.0
        %427 = vmatpush1.msra.mxu0 0.0
        %428 = vmatprep.subr.mxu0 0.0
        %429 = vmatpush1.msra.mxu0 0.0
        %430 = vmatprep.subr.mxu0 0.0
        %431 = vmatpush1.msra.mxu0 0.0
        %432 = vmatprep.subr.mxu0 0.0
        %433 = vmatpush1.msra.mxu0 0.0
        %434 = vmatprep.subr.mxu0 0.0
        %435 = vmatpush1.msra.mxu0 0.0
        %436 = vmatprep.subr.mxu0 0.0
        %437 = vmatpush1.msra.mxu0 0.0
        %438 = vmatprep.subr.mxu0 0.0
        %439 = vmatpush1.msra.mxu0 0.0
        %440 = vmatprep.subr.mxu0 0.0
        %441 = vmatpush1.msra.mxu0 0.0
        %442 = vmatprep.subr.mxu0 0.0
        %443 = vmatpush1.msra.mxu0 0.0
        %444 = vmatprep.subr.mxu0 0.0
        %445 = vmatpush1.msra.mxu0 0.0
        %446 = vmatprep.subr.mxu0 0.0
        %447 = vmatpush1.msra.mxu0 0.0
        %448 = vmatprep.subr.mxu0 0.0
        %449 = vmatpush1.msra.mxu0 0.0
        %450 = vmatprep.subr.mxu0 0.0
        %451 = vmatpush1.msra.mxu0 0.0
        %452 = vmatprep.subr.mxu0 0.0
        %453 = vmatpush1.msra.mxu0 0.0
        %454 = vmatprep.mubr.f32.mxu0 0.0
        %455 = vmatmul.mubr.f32.gmra.mrb[0].mxu0 %v385
        %v456 = vpop.f32.mrb[0].mxu0
        %v457 = vadd.f32 %v376, %v456
        %v458 = vpop.f32.mrb[0].mxu0
        %459 = vmatprep.mubr.f32.mxu0 0.0
        %460 = vmatmul.mubr.f32.gmra.mrb[0].mxu0 %v388
        %v461 = vpop.f32.mrb[0].mxu0
        %v462 = vadd.f32 %v381, %v461
        %v463 = vpop.f32.mrb[0].mxu0
        %464 = vdwg.mxu0
        %v465 = vld [vmem:[#allocation2 + $0x9] sm:$0xff]
        %v466 = vld [vmem:[#allocation2 + $0x11] sm:$0xff]
        %s467 = scalar_lea.vmem [#allocation7], 128
        %v468 = vld [vmem:[%s467] sm:$0xff]
        %v469 = vld [vmem:[%s467 + $0x8] sm:$0xff]
        %v470 = vld [vmem:[%s467 + $0x10] sm:$0xff]
        %v471 = vld [vmem:[%s467 + $0x18] sm:$0xff]
        %v472 = vld [vmem:[%s467 + $0x20] sm:$0xff]
        %v473 = vld [vmem:[%s467 + $0x28] sm:$0xff]
        %v474 = vld [vmem:[%s467 + $0x30] sm:$0xff]
        %v475 = vld [vmem:[%s467 + $0x38] sm:$0xff]
        %v477 = vsel %vm279, %v465, 0
        %v480 = vsel %vm279, %v466, 0
        %482 = vmatprep.subr.mxu0 0.0
        %483 = vmatpush1.msra.mxu0 %v468
        %484 = vmatprep.subr.mxu0 0.0
        %485 = vmatpush1.msra.mxu0 %v469
        %486 = vmatprep.subr.mxu0 0.0
        %487 = vmatpush1.msra.mxu0 %v470
        %488 = vmatprep.subr.mxu0 0.0
        %489 = vmatpush1.msra.mxu0 %v471
        %490 = vmatprep.subr.mxu0 0.0
        %491 = vmatpush1.msra.mxu0 %v472
        %492 = vmatprep.subr.mxu0 0.0
        %493 = vmatpush1.msra.mxu0 %v473
        %494 = vmatprep.subr.mxu0 0.0
        %495 = vmatpush1.msra.mxu0 %v474
        %496 = vmatprep.subr.mxu0 0.0
        %497 = vmatpush1.msra.mxu0 %v475
        %498 = vmatprep.subr.mxu0 0.0
        %499 = vmatpush1.msra.mxu0 0.0
        %500 = vmatprep.subr.mxu0 0.0
        %501 = vmatpush1.msra.mxu0 0.0
        %502 = vmatprep.subr.mxu0 0.0
        %503 = vmatpush1.msra.mxu0 0.0
        %504 = vmatprep.subr.mxu0 0.0
        %505 = vmatpush1.msra.mxu0 0.0
        %506 = vmatprep.subr.mxu0 0.0
        %507 = vmatpush1.msra.mxu0 0.0
        %508 = vmatprep.subr.mxu0 0.0
        %509 = vmatpush1.msra.mxu0 0.0
        %510 = vmatprep.subr.mxu0 0.0
        %511 = vmatpush1.msra.mxu0 0.0
        %512 = vmatprep.subr.mxu0 0.0
        %513 = vmatpush1.msra.mxu0 0.0
        %514 = vmatprep.subr.mxu0 0.0
        %515 = vmatpush1.msra.mxu0 0.0
        %516 = vmatprep.subr.mxu0 0.0
        %517 = vmatpush1.msra.mxu0 0.0
        %518 = vmatprep.subr.mxu0 0.0
        %519 = vmatpush1.msra.mxu0 0.0
        %520 = vmatprep.subr.mxu0 0.0
        %521 = vmatpush1.msra.mxu0 0.0
        %522 = vmatprep.subr.mxu0 0.0
        %523 = vmatpush1.msra.mxu0 0.0
        %524 = vmatprep.subr.mxu0 0.0
        %525 = vmatpush1.msra.mxu0 0.0
        %526 = vmatprep.subr.mxu0 0.0
        %527 = vmatpush1.msra.mxu0 0.0
        %528 = vmatprep.subr.mxu0 0.0
        %529 = vmatpush1.msra.mxu0 0.0
        %530 = vmatprep.subr.mxu0 0.0
        %531 = vmatpush1.msra.mxu0 0.0
        %532 = vmatprep.subr.mxu0 0.0
        %533 = vmatpush1.msra.mxu0 0.0
        %534 = vmatprep.subr.mxu0 0.0
        %535 = vmatpush1.msra.mxu0 0.0
        %536 = vmatprep.subr.mxu0 0.0
        %537 = vmatpush1.msra.mxu0 0.0
        %538 = vmatprep.subr.mxu0 0.0
        %539 = vmatpush1.msra.mxu0 0.0
        %540 = vmatprep.subr.mxu0 0.0
        %541 = vmatpush1.msra.mxu0 0.0
        %542 = vmatprep.subr.mxu0 0.0
        %543 = vmatpush1.msra.mxu0 0.0
        %544 = vmatprep.subr.mxu0 0.0
        %545 = vmatpush1.msra.mxu0 0.0
        %546 = vmatprep.mubr.f32.mxu0 0.0
        %547 = vmatmul.mubr.f32.gmra.mrb[0].mxu0 %v477
        %v548 = vpop.f32.mrb[0].mxu0
        %v549 = vadd.f32 0.0, %v548
        %v550 = vpop.f32.mrb[0].mxu0
        %551 = vmatprep.mubr.f32.mxu0 0.0
        %552 = vmatmul.mubr.f32.gmra.mrb[0].mxu0 %v480
        %v553 = vpop.f32.mrb[0].mxu0
        %v554 = vadd.f32 0.0, %v553
        %v555 = vpop.f32.mrb[0].mxu0
        %556 = vdwg.mxu0
        %v557 = vadd.f32 %v457, %v549
        %v558 = vadd.f32 %v462, %v554
        %v559 = vld [vmem:[%s2] sm:$0x1]
        %v561 = vlaneseq
        %v562 = vshrl.u32 %v561, 7
        %v563 = vsub.s32 0, %v562
        %v564 = vrot.slane %v559, %v563
        %v566 = vadd.f32 %v557, %v564
        %v567 = vadd.f32 %v558, %v564
        %v568 = vmax.f32 %v566, 0.0
        %v569 = vmax.f32 %v567, 0.0
        %570 = vst [vmem:[#allocation3 + $0x8] sm:$0xff] %v568
        %571 = vst [vmem:[#allocation3 + $0x10] sm:$0xff] %v569
        %v572 = vld [vmem:[#allocation3 + $0x7] sm:$0xff]
        %v573 = vld [vmem:[#allocation3 + $0xf] sm:$0xff]
        %v574 = vld [vmem:[#allocation9] sm:$0xff]
        %v575 = vld [vmem:[#allocation9 + $0x8] sm:$0xff]
        %v576 = vld [vmem:[#allocation9 + $0x10] sm:$0xff]
        %v577 = vld [vmem:[#allocation9 + $0x18] sm:$0xff]
        %v578 = vld [vmem:[#allocation9 + $0x20] sm:$0xff]
        %v579 = vld [vmem:[#allocation9 + $0x28] sm:$0xff]
        %v580 = vld [vmem:[#allocation9 + $0x30] sm:$0xff]
        %v581 = vld [vmem:[#allocation9 + $0x38] sm:$0xff]
        %v582 = vld [vmem:[#allocation9 + $0x40] sm:$0xff]
        %v583 = vld [vmem:[#allocation9 + $0x48] sm:$0xff]
        %v584 = vld [vmem:[#allocation9 + $0x50] sm:$0xff]
        %v585 = vld [vmem:[#allocation9 + $0x58] sm:$0xff]
        %v586 = vld [vmem:[#allocation9 + $0x60] sm:$0xff]
        %v587 = vld [vmem:[#allocation9 + $0x68] sm:$0xff]
        %v588 = vld [vmem:[#allocation9 + $0x70] sm:$0xff]
        %v589 = vld [vmem:[#allocation9 + $0x78] sm:$0xff]
        %v590 = vld [vmem:[#allocation3 + $0x8] sm:$0xff]
        %v591 = vld [vmem:[#allocation3 + $0x10] sm:$0xff]
        %s592 = scalar_lea.vmem [#allocation9], 128
        %v593 = vld [vmem:[%s592] sm:$0xff]
        %v594 = vld [vmem:[%s592 + $0x8] sm:$0xff]
        %v595 = vld [vmem:[%s592 + $0x10] sm:$0xff]
        %v596 = vld [vmem:[%s592 + $0x18] sm:$0xff]
        %v597 = vld [vmem:[%s592 + $0x20] sm:$0xff]
        %v598 = vld [vmem:[%s592 + $0x28] sm:$0xff]
        %v599 = vld [vmem:[%s592 + $0x30] sm:$0xff]
        %v600 = vld [vmem:[%s592 + $0x38] sm:$0xff]
        %v601 = vld [vmem:[%s592 + $0x40] sm:$0xff]
        %v602 = vld [vmem:[%s592 + $0x48] sm:$0xff]
        %v603 = vld [vmem:[%s592 + $0x50] sm:$0xff]
        %v604 = vld [vmem:[%s592 + $0x58] sm:$0xff]
        %v605 = vld [vmem:[%s592 + $0x60] sm:$0xff]
        %v606 = vld [vmem:[%s592 + $0x68] sm:$0xff]
        %v607 = vld [vmem:[%s592 + $0x70] sm:$0xff]
        %v608 = vld [vmem:[%s592 + $0x78] sm:$0xff]
        %609 = vmatprep.subr.mxu0 0.0
        %610 = vmatpush1.msra.mxu0 %v593
        %611 = vmatprep.subr.mxu0 0.0
        %612 = vmatpush1.msra.mxu0 %v594
        %613 = vmatprep.subr.mxu0 0.0
        %614 = vmatpush1.msra.mxu0 %v595
        %615 = vmatprep.subr.mxu0 0.0
        %616 = vmatpush1.msra.mxu0 %v596
        %617 = vmatprep.subr.mxu0 0.0
        %618 = vmatpush1.msra.mxu0 %v597
        %619 = vmatprep.subr.mxu0 0.0
        %620 = vmatpush1.msra.mxu0 %v598
        %621 = vmatprep.subr.mxu0 0.0
        %622 = vmatpush1.msra.mxu0 %v599
        %623 = vmatprep.subr.mxu0 0.0
        %624 = vmatpush1.msra.mxu0 %v600
        %625 = vmatprep.subr.mxu0 0.0
        %626 = vmatpush1.msra.mxu0 %v601
        %627 = vmatprep.subr.mxu0 0.0
        %628 = vmatpush1.msra.mxu0 %v602
        %629 = vmatprep.subr.mxu0 0.0
        %630 = vmatpush1.msra.mxu0 %v603
        %631 = vmatprep.subr.mxu0 0.0
        %632 = vmatpush1.msra.mxu0 %v604
        %633 = vmatprep.subr.mxu0 0.0
        %634 = vmatpush1.msra.mxu0 %v605
        %635 = vmatprep.subr.mxu0 0.0
        %636 = vmatpush1.msra.mxu0 %v606
        %637 = vmatprep.subr.mxu0 0.0
        %638 = vmatpush1.msra.mxu0 %v607
        %639 = vmatprep.subr.mxu0 0.0
        %640 = vmatpush1.msra.mxu0 %v608
        %641 = vmatprep.subr.mxu0 0.0
        %642 = vmatpush1.msra.mxu0 0.0
        %643 = vmatprep.subr.mxu0 0.0
        %644 = vmatpush1.msra.mxu0 0.0
        %645 = vmatprep.subr.mxu0 0.0
        %646 = vmatpush1.msra.mxu0 0.0
        %647 = vmatprep.subr.mxu0 0.0
        %648 = vmatpush1.msra.mxu0 0.0
        %649 = vmatprep.subr.mxu0 0.0
        %650 = vmatpush1.msra.mxu0 0.0
        %651 = vmatprep.subr.mxu0 0.0
        %652 = vmatpush1.msra.mxu0 0.0
        %653 = vmatprep.subr.mxu0 0.0
        %654 = vmatpush1.msra.mxu0 0.0
        %655 = vmatprep.subr.mxu0 0.0
        %656 = vmatpush1.msra.mxu0 0.0
        %657 = vmatprep.subr.mxu0 0.0
        %658 = vmatpush1.msra.mxu0 0.0
        %659 = vmatprep.subr.mxu0 0.0
        %660 = vmatpush1.msra.mxu0 0.0
        %661 = vmatprep.subr.mxu0 0.0
        %662 = vmatpush1.msra.mxu0 0.0
        %663 = vmatprep.subr.mxu0 0.0
        %664 = vmatpush1.msra.mxu0 0.0
        %665 = vmatprep.subr.mxu0 0.0
        %666 = vmatpush1.msra.mxu0 0.0
        %667 = vmatprep.subr.mxu0 0.0
        %668 = vmatpush1.msra.mxu0 0.0
        %669 = vmatprep.subr.mxu0 0.0
        %670 = vmatpush1.msra.mxu0 0.0
        %671 = vmatprep.subr.mxu0 0.0
        %672 = vmatpush1.msra.mxu0 0.0
        %673 = vmatprep.mubr.f32.mxu0 0.0
        %674 = vmatmul.mubr.f32.gmra.mrb[0].mxu0 %v590
        %v675 = vpop.f32.mrb[0].mxu0
        %v676 = vadd.f32 0.0, %v675
        %v677 = vpop.f32.mrb[0].mxu0
        %678 = vmatprep.mubr.f32.mxu0 0.0
        %679 = vmatmul.mubr.f32.gmra.mrb[0].mxu0 %v591
        %v680 = vpop.f32.mrb[0].mxu0
        %v681 = vadd.f32 0.0, %v680
        %v682 = vpop.f32.mrb[0].mxu0
        %683 = vdwg.mxu0
        %684 = vmatprep.subr.mxu0 0.0
        %685 = vmatpush1.msra.mxu0 %v574
        %686 = vmatprep.subr.mxu0 0.0
        %687 = vmatpush1.msra.mxu0 %v575
        %688 = vmatprep.subr.mxu0 0.0
        %689 = vmatpush1.msra.mxu0 %v576
        %690 = vmatprep.subr.mxu0 0.0
        %691 = vmatpush1.msra.mxu0 %v577
        %692 = vmatprep.subr.mxu0 0.0
        %693 = vmatpush1.msra.mxu0 %v578
        %694 = vmatprep.subr.mxu0 0.0
        %695 = vmatpush1.msra.mxu0 %v579
        %696 = vmatprep.subr.mxu0 0.0
        %697 = vmatpush1.msra.mxu0 %v580
        %698 = vmatprep.subr.mxu0 0.0
        %699 = vmatpush1.msra.mxu0 %v581
        %700 = vmatprep.subr.mxu0 0.0
        %701 = vmatpush1.msra.mxu0 %v582
        %702 = vmatprep.subr.mxu0 0.0
        %703 = vmatpush1.msra.mxu0 %v583
        %704 = vmatprep.subr.mxu0 0.0
        %705 = vmatpush1.msra.mxu0 %v584
        %706 = vmatprep.subr.mxu0 0.0
        %707 = vmatpush1.msra.mxu0 %v585
        %708 = vmatprep.subr.mxu0 0.0
        %709 = vmatpush1.msra.mxu0 %v586
        %710 = vmatprep.subr.mxu0 0.0
        %711 = vmatpush1.msra.mxu0 %v587
        %712 = vmatprep.subr.mxu0 0.0
        %713 = vmatpush1.msra.mxu0 %v588
        %714 = vmatprep.subr.mxu0 0.0
        %715 = vmatpush1.msra.mxu0 %v589
        %716 = vmatprep.subr.mxu0 0.0
        %717 = vmatpush1.msra.mxu0 0.0
        %718 = vmatprep.subr.mxu0 0.0
        %719 = vmatpush1.msra.mxu0 0.0
        %720 = vmatprep.subr.mxu0 0.0
        %721 = vmatpush1.msra.mxu0 0.0
        %722 = vmatprep.subr.mxu0 0.0
        %723 = vmatpush1.msra.mxu0 0.0
        %724 = vmatprep.subr.mxu0 0.0
        %725 = vmatpush1.msra.mxu0 0.0
        %726 = vmatprep.subr.mxu0 0.0
        %727 = vmatpush1.msra.mxu0 0.0
        %728 = vmatprep.subr.mxu0 0.0
        %729 = vmatpush1.msra.mxu0 0.0
        %730 = vmatprep.subr.mxu0 0.0
        %731 = vmatpush1.msra.mxu0 0.0
        %732 = vmatprep.subr.mxu0 0.0
        %733 = vmatpush1.msra.mxu0 0.0
        %734 = vmatprep.subr.mxu0 0.0
        %735 = vmatpush1.msra.mxu0 0.0
        %736 = vmatprep.subr.mxu0 0.0
        %737 = vmatpush1.msra.mxu0 0.0
        %738 = vmatprep.subr.mxu0 0.0
        %739 = vmatpush1.msra.mxu0 0.0
        %740 = vmatprep.subr.mxu0 0.0
        %741 = vmatpush1.msra.mxu0 0.0
        %742 = vmatprep.subr.mxu0 0.0
        %743 = vmatpush1.msra.mxu0 0.0
        %744 = vmatprep.subr.mxu0 0.0
        %745 = vmatpush1.msra.mxu0 0.0
        %746 = vmatprep.subr.mxu0 0.0
        %747 = vmatpush1.msra.mxu0 0.0
        %748 = vmatprep.mubr.f32.mxu0 0.0
        %749 = vmatmul.mubr.f32.gmra.mrb[0].mxu0 %v572
        %v750 = vpop.f32.mrb[0].mxu0
        %v751 = vadd.f32 %v676, %v750
        %v752 = vpop.f32.mrb[0].mxu0
        %753 = vmatprep.mubr.f32.mxu0 0.0
        %754 = vmatmul.mubr.f32.gmra.mrb[0].mxu0 %v573
        %v755 = vpop.f32.mrb[0].mxu0
        %v756 = vadd.f32 %v681, %v755
        %v757 = vpop.f32.mrb[0].mxu0
        %758 = vdwg.mxu0
        %v759 = vld [vmem:[#allocation3 + $0x9] sm:$0xff]
        %v760 = vld [vmem:[#allocation3 + $0x11] sm:$0xff]
        %s761 = scalar_lea.vmem [#allocation9], 256
        %v762 = vld [vmem:[%s761] sm:$0xff]
        %v763 = vld [vmem:[%s761 + $0x8] sm:$0xff]
        %v764 = vld [vmem:[%s761 + $0x10] sm:$0xff]
        %v765 = vld [vmem:[%s761 + $0x18] sm:$0xff]
        %v766 = vld [vmem:[%s761 + $0x20] sm:$0xff]
        %v767 = vld [vmem:[%s761 + $0x28] sm:$0xff]
        %v768 = vld [vmem:[%s761 + $0x30] sm:$0xff]
        %v769 = vld [vmem:[%s761 + $0x38] sm:$0xff]
        %v770 = vld [vmem:[%s761 + $0x40] sm:$0xff]
        %v771 = vld [vmem:[%s761 + $0x48] sm:$0xff]
        %v772 = vld [vmem:[%s761 + $0x50] sm:$0xff]
        %v773 = vld [vmem:[%s761 + $0x58] sm:$0xff]
        %v774 = vld [vmem:[%s761 + $0x60] sm:$0xff]
        %v775 = vld [vmem:[%s761 + $0x68] sm:$0xff]
        %v776 = vld [vmem:[%s761 + $0x70] sm:$0xff]
        %v777 = vld [vmem:[%s761 + $0x78] sm:$0xff]
        %778 = vmatprep.subr.mxu0 0.0
        %779 = vmatpush1.msra.mxu0 %v762
        %780 = vmatprep.subr.mxu0 0.0
        %781 = vmatpush1.msra.mxu0 %v763
        %782 = vmatprep.subr.mxu0 0.0
        %783 = vmatpush1.msra.mxu0 %v764
        %784 = vmatprep.subr.mxu0 0.0
        %785 = vmatpush1.msra.mxu0 %v765
        %786 = vmatprep.subr.mxu0 0.0
        %787 = vmatpush1.msra.mxu0 %v766
        %788 = vmatprep.subr.mxu0 0.0
        %789 = vmatpush1.msra.mxu0 %v767
        %790 = vmatprep.subr.mxu0 0.0
        %791 = vmatpush1.msra.mxu0 %v768
        %792 = vmatprep.subr.mxu0 0.0
        %793 = vmatpush1.msra.mxu0 %v769
        %794 = vmatprep.subr.mxu0 0.0
        %795 = vmatpush1.msra.mxu0 %v770
        %796 = vmatprep.subr.mxu0 0.0
        %797 = vmatpush1.msra.mxu0 %v771
        %798 = vmatprep.subr.mxu0 0.0
        %799 = vmatpush1.msra.mxu0 %v772
        %800 = vmatprep.subr.mxu0 0.0
        %801 = vmatpush1.msra.mxu0 %v773
        %802 = vmatprep.subr.mxu0 0.0
        %803 = vmatpush1.msra.mxu0 %v774
        %804 = vmatprep.subr.mxu0 0.0
        %805 = vmatpush1.msra.mxu0 %v775
        %806 = vmatprep.subr.mxu0 0.0
        %807 = vmatpush1.msra.mxu0 %v776
        %808 = vmatprep.subr.mxu0 0.0
        %809 = vmatpush1.msra.mxu0 %v777
        %810 = vmatprep.subr.mxu0 0.0
        %811 = vmatpush1.msra.mxu0 0.0
        %812 = vmatprep.subr.mxu0 0.0
        %813 = vmatpush1.msra.mxu0 0.0
        %814 = vmatprep.subr.mxu0 0.0
        %815 = vmatpush1.msra.mxu0 0.0
        %816 = vmatprep.subr.mxu0 0.0
        %817 = vmatpush1.msra.mxu0 0.0
        %818 = vmatprep.subr.mxu0 0.0
        %819 = vmatpush1.msra.mxu0 0.0
        %820 = vmatprep.subr.mxu0 0.0
        %821 = vmatpush1.msra.mxu0 0.0
        %822 = vmatprep.subr.mxu0 0.0
        %823 = vmatpush1.msra.mxu0 0.0
        %824 = vmatprep.subr.mxu0 0.0
        %825 = vmatpush1.msra.mxu0 0.0
        %826 = vmatprep.subr.mxu0 0.0
        %827 = vmatpush1.msra.mxu0 0.0
        %828 = vmatprep.subr.mxu0 0.0
        %829 = vmatpush1.msra.mxu0 0.0
        %830 = vmatprep.subr.mxu0 0.0
        %831 = vmatpush1.msra.mxu0 0.0
        %832 = vmatprep.subr.mxu0 0.0
        %833 = vmatpush1.msra.mxu0 0.0
        %834 = vmatprep.subr.mxu0 0.0
        %835 = vmatpush1.msra.mxu0 0.0
        %836 = vmatprep.subr.mxu0 0.0
        %837 = vmatpush1.msra.mxu0 0.0
        %838 = vmatprep.subr.mxu0 0.0
        %839 = vmatpush1.msra.mxu0 0.0
        %840 = vmatprep.subr.mxu0 0.0
        %841 = vmatpush1.msra.mxu0 0.0
        %842 = vmatprep.mubr.f32.mxu0 0.0
        %843 = vmatmul.mubr.f32.gmra.mrb[0].mxu0 %v759
        %v844 = vpop.f32.mrb[0].mxu0
        %v845 = vadd.f32 0.0, %v844
        %v846 = vpop.f32.mrb[0].mxu0
        %847 = vmatprep.mubr.f32.mxu0 0.0
        %848 = vmatmul.mubr.f32.gmra.mrb[0].mxu0 %v760
        %v849 = vpop.f32.mrb[0].mxu0
        %v850 = vadd.f32 0.0, %v849
        %v851 = vpop.f32.mrb[0].mxu0
        %852 = vdwg.mxu0
        %v853 = vadd.f32 %v751, %v845
        %v854 = vadd.f32 %v756, %v850
        %v855 = vld [vmem:[%s4] sm:$0x1]
        %v857 = vlaneseq
        %v858 = vshrl.u32 %v857, 7
        %v859 = vsub.s32 0, %v858
        %v860 = vrot.slane %v855, %v859
        %v862 = vadd.f32 %v853, %v860
        %v863 = vadd.f32 %v854, %v860
        %v864 = vmax.f32 %v862, 0.0
        %v865 = vmax.f32 %v863, 0.0
        %866 = vst [vmem:[%s271] sm:$0xff] %v864
        %867 = vst [vmem:[%s271 + $0x8] sm:$0xff] %v865
        %s868 = sand.u32 %s141, 1
        %s869 = scalar_lea.sflag [#allocation6], %s868
        %s870 = sand.u32 %s141, 1
        %s871 = smul.addr %s870, 16
        %s872 = scalar_lea.vmem [#allocation10], %s871
        // Predicated region
        $region53: #{tpu_custom_call.1} parent=39 // pred_check
          %p873 = pneg %p151
        $region54: #{tpu_custom_call.1} parent=39 // pred_check_branch
          %875 = sbr.rel (%p873) target = $region56
        $region55: #{tpu_custom_call.1} parent=39 // pred_region
          %s877 = ssub.s32 256, 256
          %878 = vsyncadd %s869, %s877
          %s879 = smul.addr %s23, 2
          %s880 = smul.addr %s879, 128
          %s881 = scalar_lea.hbm %s5, %s880
          %s882 = sshll.u32 %s872, 4
          %s883 = int_to_ptr.vmem [resolvable:$true] %s882
          %888 = dma.vmem_to_hbm [thread:$0]  %s883, 256, %s881, %s869, 128, 128, 8
        $region56: #{tpu_custom_call.1} parent=39 // pred_fallthru
          _
      $region40: #{tpu_custom_call.1} parent=5 // pred_fallthru
        _
      %p889 = scmp.le.s32.totalorder 2, %s18
      // Predicated region
      $region57: #{tpu_custom_call.1} parent=5 // pred_check
        %p890 = pneg %p889
      $region58: #{tpu_custom_call.1} parent=5 // pred_check_branch
        %892 = sbr.rel (%p890) target = $region60
      $region59: #{tpu_custom_call.1} parent=5 // pred_region
        %s893 = ssub.s32 %s18, 2
        // Predicated region
        $region61: #{tpu_custom_call.1} parent=59 // pred_check
          %p894 = pneg %p157
        $region62: #{tpu_custom_call.1} parent=59 // pred_check_branch
          %896 = sbr.rel (%p894) target = $region64
        $region63: #{tpu_custom_call.1} parent=59 // pred_region
          %s897 = sand.u32 %s142, 1
          %s898 = scalar_lea.sflag [#allocation6], %s897
          %s899 = sand.u32 %s142, 1
          %s900 = smul.addr %s899, 16
          %s901 = scalar_lea.vmem [#allocation10], %s900
          %902 = dma.done %s898, 256
        $region64: #{tpu_custom_call.1} parent=59 // pred_fallthru
          _
      $region60: #{tpu_custom_call.1} parent=5 // pred_fallthru
        _
    $region6: #{tpu_custom_call.1} parent=1 // loop_footer
      %s22 = sadd.s32 1, %s18
    $region7: #{tpu_custom_call.1} parent=1 // loop_footer_branch
      %17 = sbr.rel target = $region3
    $region8: #{tpu_custom_call.1} parent=1 // loop_exit
      _
    %903 = vsyncpa [#allocation5], 1
    %s904 = scalar_lea.sflag [#allocation5], 1
    %905 = vsyncpa %s904, 1
    %906 = vsyncpa [#allocation8], 1
    %907 = vsyncpa [#allocation6], 1
    %s908 = scalar_lea.sflag [#allocation6], 1
    %909 = vsyncpa %s908, 1

</llo_original>
